<compile_context>
chip_gen: v7x
topology: tpu7x:2x2x1
jax: 0.10.0
libtpu: 0.0.40
codegen_flags: <defaults>
</compile_context>

<pallas_src>
import functools

import jax
import jax.numpy as jnp
from jax.experimental import pallas as pl
from jax.experimental.pallas import tpu as pltpu

D_IN, D_H1, D_H2, D_OUT = 64, 32, 12, 3

DEFAULT_TILE_B = 16384            # rows per grid step; sweep 8192-65536 per generation
VMEM_LIMIT_BYTES = 48 * 1024 * 1024   # covers 2x in / 2x out buffers + padded intermediates


def mlp_kernel(x_ref, w1_ref, b1_ref, w2_ref, b2_ref, w3_ref, b3_ref, o_ref):
    # x arrives in its HBM dtype (single read pass); cast to the weight dtype (bf16 by
    # default) in-vreg so the MXU sees bf16 x bf16 -> f32.
    x = x_ref[...].astype(w1_ref.dtype)                                  # (TB, 64)

    h1 = jnp.dot(x, w1_ref[...], preferred_element_type=jnp.float32)    # (TB, 32) f32 acc
    h1 = jnp.maximum(h1 + b1_ref[...], 0.0)
    # TODO(synk): Dropout(p=0.2) would go here in training mode (identity in eval mode).

    h2 = jnp.dot(h1.astype(w2_ref.dtype), w2_ref[...],
                 preferred_element_type=jnp.float32)                     # (TB, 12)
    h2 = jnp.maximum(h2 + b2_ref[...], 0.0)

    h3 = jnp.dot(h2.astype(w3_ref.dtype), w3_ref[...],
                 preferred_element_type=jnp.float32)                     # (TB, 3)
    h3 = jnp.maximum(h3 + b3_ref[...], 0.0)

    # Lane-dense store: (TB, 3) -> (3, TB) via XLU transpose (XLU slot has slack here);
    # avoids masked 3-wide vst.msk stores and the TB x 128-lane padded output buffer.
    o_ref[...] = h3.T.astype(o_ref.dtype)


@functools.partial(jax.jit, static_argnames=("tile_b", "use_bf16"))
def deep_nn_forward(x, params, *, tile_b=DEFAULT_TILE_B, use_bf16=True):
    w1, b1, w2, b2, w3, b3 = params
    B = x.shape[0]
    out_dtype = x.dtype

    if use_bf16:
        # Tiny (10 KiB total) one-off casts; x itself is NOT pre-cast (kernel casts in-vreg).
        w1, w2, w3 = (w.astype(jnp.bfloat16) for w in (w1, w2, w3))

    # Batch tile: always a multiple of 128 (keeps the transposed out block lane-aligned and
    # the x block sublane-aligned for any B; partial last block is masked by Pallas).
    # Capped at ~cdiv(B, 2) so the grid has >= 2 steps when possible (v7x dual TensorCore).
    half_b = ((B + 1) // 2 + 127) // 128 * 128
    tb = min(int(tile_b), half_b)
    tb = max(128, (tb // 128) * 128)
    n_tiles = pl.cdiv(B, tb)

    weight_bytes = sum(int(a.size) * a.dtype.itemsize for a in (w1, b1, w2, b2, w3, b3))
    cost = pl.CostEstimate(
        flops=2 * B * (D_IN * D_H1 + D_H1 * D_H2 + D_H2 * D_OUT),
        bytes_accessed=(B * D_IN * x.dtype.itemsize
                        + B * D_OUT * jnp.dtype(out_dtype).itemsize
                        + weight_bytes),
        transcendentals=0,
    )

    const = lambda i: (0, 0)   # weights/biases: fetched once, resident across grid steps

    out_t = pl.pallas_call(
        mlp_kernel,
        out_shape=jax.ShapeDtypeStruct((D_OUT, B), out_dtype),    # transposed, lane-dense
        grid=(n_tiles,),
        in_specs=[
            pl.BlockSpec((tb, D_IN), lambda i: (i, 0)),           # x: tiled over batch
            pl.BlockSpec((D_IN, D_H1), const),                    # w1
            pl.BlockSpec((1, D_H1), const),                       # b1
            pl.BlockSpec((D_H1, D_H2), const),                    # w2
            pl.BlockSpec((1, D_H2), const),                       # b2
            pl.BlockSpec((D_H2, D_OUT), const),                   # w3
            pl.BlockSpec((1, D_OUT), const),                      # b3
        ],
        out_specs=pl.BlockSpec((D_OUT, tb), lambda i: (0, i)),
        compiler_params=pltpu.CompilerParams(
            dimension_semantics=("parallel",),                    # megacore-shardable (v7x)
            vmem_limit_bytes=VMEM_LIMIT_BYTES,
        ),
        cost_estimate=cost,
    )(x, w1, b1, w2, b2, w3, b3)

    # Tiny (3, B) -> (B, 3) transpose back in the wrapper (~12 B/row, negligible vs x reads).
    return out_t.T


def init_params(key):
    """Deterministic init mimicking torch.nn.Linear default (U[-1/sqrt(fan_in), +1/sqrt(fan_in)])."""
    def linear(key, fan_in, fan_out):
        kw, kb = jax.random.split(key)
        bound = 1.0 / jnp.sqrt(fan_in)
        # stored as (in, out) so the kernel computes x @ W + b
        w = jax.random.uniform(kw, (fan_in, fan_out), jnp.float32, -bound, bound)
        b = jax.random.uniform(kb, (1, fan_out), jnp.float32, -bound, bound)
        return w, b

    k1, k2, k3 = jax.random.split(key, 3)
    w1, b1 = linear(k1, D_IN, D_H1)
    w2, b2 = linear(k2, D_H1, D_H2)
    w3, b3 = linear(k3, D_H2, D_OUT)
    return (w1, b1, w2, b2, w3, b3)


def reference_forward(x, params):
    w1, b1, w2, b2, w3, b3 = params
    h = jnp.maximum(x @ w1 + b1, 0.0)
    h = jnp.maximum(h @ w2 + b2, 0.0)
    h = jnp.maximum(h @ w3 + b3, 0.0)
    return h


if __name__ == "__main__":
    key = jax.random.PRNGKey(0)
    kx, kp = jax.random.split(key)
    params = init_params(kp)

    # Small single-tile case (batch of 64-dim features), bf16 compute path.
    B = 64
    x = jax.random.normal(kx, (B, D_IN), dtype=jnp.float32)
    out = jax.block_until_ready(deep_nn_forward(x, params))
    ref = reference_forward(x, params)
    assert out.shape == (B, D_OUT), out.shape
    assert jnp.allclose(out, ref, atol=5e-2, rtol=5e-2), "mismatch vs reference (bf16, small batch)"

    # Same batch, f32 weights (no bf16 casts) for tighter parity.
    out_f32 = jax.block_until_ready(deep_nn_forward(x, params, use_bf16=False))
    assert jnp.allclose(out_f32, ref, atol=1e-2, rtol=1e-2), "mismatch vs reference (f32 path)"

    # Multi-tile + ragged-batch case exercising the grid, weight residency and masked last block.
    B2 = 300
    x2 = jax.random.normal(jax.random.fold_in(kx, 1), (B2, D_IN), dtype=jnp.float32)
    out2 = jax.block_until_ready(deep_nn_forward(x2, params, tile_b=128))
    ref2 = reference_forward(x2, params)
    assert out2.shape == (B2, D_OUT), out2.shape
    assert jnp.allclose(out2, ref2, atol=5e-2, rtol=5e-2), "mismatch vs reference (tiled ragged batch)"

    print("KERNEL_OK")
</pallas_src>

<mosaic_0001>
module attributes {stable_mosaic.version = 11 : i64} {
  func.func @mlp_kernel(%arg0: i32, %arg1: memref<128x64xf32, #tpu.memory_space<vmem>>, %arg2: memref<64x32xbf16, #tpu.memory_space<vmem>>, %arg3: memref<1x32xf32, #tpu.memory_space<vmem>>, %arg4: memref<32x12xbf16, #tpu.memory_space<vmem>>, %arg5: memref<1x12xf32, #tpu.memory_space<vmem>>, %arg6: memref<12x3xbf16, #tpu.memory_space<vmem>>, %arg7: memref<1x3xf32, #tpu.memory_space<vmem>>, %arg8: memref<3x128xf32, #tpu.memory_space<vmem>>) attributes {dimension_semantics = [#tpu.dimension_semantics<parallel>], iteration_bounds = array<i64: 1>, scalar_prefetch = 0 : i64, scratch_operands = 0 : i64, tpu.core_type = #tpu.core_type<tc>, window_params = [{transform_indices = @transform_0, window_bounds = array<i64: 128, 64>}, {pipeline_mode = #tpu.pipeline_mode<synchronous>, transform_indices = @transform_1, window_bounds = array<i64: 64, 32>}, {pipeline_mode = #tpu.pipeline_mode<synchronous>, transform_indices = @transform_2, window_bounds = array<i64: 1, 32>}, {pipeline_mode = #tpu.pipeline_mode<synchronous>, transform_indices = @transform_3, window_bounds = array<i64: 32, 12>}, {pipeline_mode = #tpu.pipeline_mode<synchronous>, transform_indices = @transform_4, window_bounds = array<i64: 1, 12>}, {pipeline_mode = #tpu.pipeline_mode<synchronous>, transform_indices = @transform_5, window_bounds = array<i64: 12, 3>}, {pipeline_mode = #tpu.pipeline_mode<synchronous>, transform_indices = @transform_6, window_bounds = array<i64: 1, 3>}, {transform_indices = @transform_7, window_bounds = array<i64: 3, 128>}]} {
    %c0 = arith.constant 0 : index
    %c0_0 = arith.constant 0 : index
    %0 = vector.load %arg1[%c0, %c0_0] : memref<128x64xf32, #tpu.memory_space<vmem>>, vector<128x64xf32>
    %1 = arith.truncf %0 : vector<128x64xf32> to vector<128x64xbf16>
    %c0_1 = arith.constant 0 : index
    %c0_2 = arith.constant 0 : index
    %2 = vector.load %arg2[%c0_1, %c0_2] : memref<64x32xbf16, #tpu.memory_space<vmem>>, vector<64x32xbf16>
    %cst = arith.constant dense<0.000000e+00> : vector<128x32xf32>
    %3 = tpu.matmul %1, %2, %cst {dimension_numbers = #tpu.dot_dimension_numbers<[1], [0], [0], [1], [0, 0, 1, 1], [], []>} : vector<128x64xbf16>, vector<64x32xbf16>, vector<128x32xf32> -> vector<128x32xf32>
    %c0_3 = arith.constant 0 : index
    %c0_4 = arith.constant 0 : index
    %4 = vector.load %arg3[%c0_3, %c0_4] : memref<1x32xf32, #tpu.memory_space<vmem>>, vector<1x32xf32>
    %5 = vector.broadcast %4 : vector<1x32xf32> to vector<128x32xf32>
    %6 = arith.addf %3, %5 : vector<128x32xf32>
    %cst_5 = arith.constant 0.000000e+00 : f32
    %7 = vector.broadcast %cst_5 : f32 to vector<128x32xf32>
    %8 = arith.maximumf %6, %7 : vector<128x32xf32>
    %9 = arith.truncf %8 : vector<128x32xf32> to vector<128x32xbf16>
    %c0_6 = arith.constant 0 : index
    %c0_7 = arith.constant 0 : index
    %10 = vector.load %arg4[%c0_6, %c0_7] : memref<32x12xbf16, #tpu.memory_space<vmem>>, vector<32x12xbf16>
    %cst_8 = arith.constant dense<0.000000e+00> : vector<128x12xf32>
    %11 = tpu.matmul %9, %10, %cst_8 {dimension_numbers = #tpu.dot_dimension_numbers<[1], [0], [0], [1], [0, 0, 1, 1], [], []>} : vector<128x32xbf16>, vector<32x12xbf16>, vector<128x12xf32> -> vector<128x12xf32>
    %c0_9 = arith.constant 0 : index
    %c0_10 = arith.constant 0 : index
    %12 = vector.load %arg5[%c0_9, %c0_10] : memref<1x12xf32, #tpu.memory_space<vmem>>, vector<1x12xf32>
    %13 = vector.broadcast %12 : vector<1x12xf32> to vector<128x12xf32>
    %14 = arith.addf %11, %13 : vector<128x12xf32>
    %cst_11 = arith.constant 0.000000e+00 : f32
    %15 = vector.broadcast %cst_11 : f32 to vector<128x12xf32>
    %16 = arith.maximumf %14, %15 : vector<128x12xf32>
    %17 = arith.truncf %16 : vector<128x12xf32> to vector<128x12xbf16>
    %c0_12 = arith.constant 0 : index
    %c0_13 = arith.constant 0 : index
    %18 = vector.load %arg6[%c0_12, %c0_13] : memref<12x3xbf16, #tpu.memory_space<vmem>>, vector<12x3xbf16>
    %cst_14 = arith.constant dense<0.000000e+00> : vector<128x3xf32>
    %19 = tpu.matmul %17, %18, %cst_14 {dimension_numbers = #tpu.dot_dimension_numbers<[1], [0], [0], [1], [0, 0, 1, 1], [], []>} : vector<128x12xbf16>, vector<12x3xbf16>, vector<128x3xf32> -> vector<128x3xf32>
    %c0_15 = arith.constant 0 : index
    %c0_16 = arith.constant 0 : index
    %20 = vector.load %arg7[%c0_15, %c0_16] : memref<1x3xf32, #tpu.memory_space<vmem>>, vector<1x3xf32>
    %21 = vector.broadcast %20 : vector<1x3xf32> to vector<128x3xf32>
    %22 = arith.addf %19, %21 : vector<128x3xf32>
    %cst_17 = arith.constant 0.000000e+00 : f32
    %23 = vector.broadcast %cst_17 : f32 to vector<128x3xf32>
    %24 = arith.maximumf %22, %23 : vector<128x3xf32>
    %25 = tpu.transpose %24, [1, 0] : vector<128x3xf32> -> vector<3x128xf32>
    %c0_18 = arith.constant 0 : index
    %c0_19 = arith.constant 0 : index
    %26 = vector.load %arg8[%c0_18, %c0_19] : memref<3x128xf32, #tpu.memory_space<vmem>>, vector<3x128xf32>
    tpu.vector_store %arg8[%c0_18, %c0_19], %25 {strides = array<i32>} : memref<3x128xf32, #tpu.memory_space<vmem>>, vector<3x128xf32>,
    return
  }
  func.func @transform_0(%arg0: i32) -> (i32, i32) {
    %c0_i32 = arith.constant 0 : i32
    %c0_i32_0 = arith.constant 0 : i32
    return %arg0, %c0_i32 : i32, i32
  }
  func.func @transform_1(%arg0: i32) -> (i32, i32) {
    %c0_i32 = arith.constant 0 : i32
    %c0_i32_0 = arith.constant 0 : i32
    %c0_i32_1 = arith.constant 0 : i32
    return %c0_i32, %c0_i32_0 : i32, i32
  }
  func.func @transform_2(%arg0: i32) -> (i32, i32) {
    %c0_i32 = arith.constant 0 : i32
    %c0_i32_0 = arith.constant 0 : i32
    %c0_i32_1 = arith.constant 0 : i32
    return %c0_i32, %c0_i32_0 : i32, i32
  }
  func.func @transform_3(%arg0: i32) -> (i32, i32) {
    %c0_i32 = arith.constant 0 : i32
    %c0_i32_0 = arith.constant 0 : i32
    %c0_i32_1 = arith.constant 0 : i32
    return %c0_i32, %c0_i32_0 : i32, i32
  }
  func.func @transform_4(%arg0: i32) -> (i32, i32) {
    %c0_i32 = arith.constant 0 : i32
    %c0_i32_0 = arith.constant 0 : i32
    %c0_i32_1 = arith.constant 0 : i32
    return %c0_i32, %c0_i32_0 : i32, i32
  }
  func.func @transform_5(%arg0: i32) -> (i32, i32) {
    %c0_i32 = arith.constant 0 : i32
    %c0_i32_0 = arith.constant 0 : i32
    %c0_i32_1 = arith.constant 0 : i32
    return %c0_i32, %c0_i32_0 : i32, i32
  }
  func.func @transform_6(%arg0: i32) -> (i32, i32) {
    %c0_i32 = arith.constant 0 : i32
    %c0_i32_0 = arith.constant 0 : i32
    %c0_i32_1 = arith.constant 0 : i32
    return %c0_i32, %c0_i32_0 : i32, i32
  }
  func.func @transform_7(%arg0: i32) -> (i32, i32) {
    %c0_i32 = arith.constant 0 : i32
    %c0_i32_0 = arith.constant 0 : i32
    return %c0_i32, %arg0 : i32, i32
  }
}

</mosaic_0001>

<llo_original>
// kernel: deep_nn_forward.1
$region0: #{deep_nn_forward.1}
  #allocation0 [shape = 'u32[]', space=smem, size = 0x4, offset = 0x4, fixed_abs, tag = 'smem constant byte address 0x4 - core index']
  #allocation1 [shape = 'u32[144,128]{1,0:T(1,128)}', space=vmem, size = 0x12000, scoped, tag = 'internal scratch']
  %s0 = inlined_call_operand.vmem [shape: f32[64,64], index: 0, kind: input, shape index: {}]
  %s1 = inlined_call_operand.vmem [shape: bf16[64,32], index: 1, kind: input, shape index: {}]
  %s2 = inlined_call_operand.vmem [shape: f32[1,32], index: 2, kind: input, shape index: {}]
  %s3 = inlined_call_operand.vmem [shape: bf16[32,12], index: 3, kind: input, shape index: {}]
  %s4 = inlined_call_operand.vmem [shape: f32[1,12], index: 4, kind: input, shape index: {}]
  %s5 = inlined_call_operand.vmem [shape: bf16[12,3], index: 5, kind: input, shape index: {}]
  %s6 = inlined_call_operand.vmem [shape: f32[1,3], index: 6, kind: input, shape index: {}]
  %s7 = inlined_call_operand.hbm [shape: f32[3,64], index: 7, kind: output, shape index: {}]
  %s8 = sld [smem:[#allocation0]]
  $region38: #{deep_nn_forward.1} parent=0
    _
  %s10 = ssub.s32 1, %s8
  %s11 = scalar_select 0, %s10, %s8
  $region1: #{deep_nn_forward.1} parent=0
    #allocation2 [shape = 'u8[2048]{0}', space=vmem, size = 0x800, scoped, tag = 'output window, operand 0, single buffered']
    #allocation3 [shape = 's32[1]{0}', space=sflag, size = 0x4, scoped, tag = 'scoped memory for deep_nn_forward.1']
    %12 = vsyncpa [#allocation3], 0
    // Predicated region
    $region2: #{deep_nn_forward.1} parent=1 // pred_check
      _
    $region3: #{deep_nn_forward.1} parent=1 // pred_check_branch
      %14 = sbr.rel (0) target = $region5
    $region4: #{deep_nn_forward.1} parent=1 // pred_region
      _
    $region5: #{deep_nn_forward.1} parent=1 // pred_fallthru
      _
    // Predicated region
    $region6: #{deep_nn_forward.1} parent=1 // pred_check
      _
    $region7: #{deep_nn_forward.1} parent=1 // pred_check_branch
      %16 = sbr.rel (0) target = $region9
    $region8: #{deep_nn_forward.1} parent=1 // pred_region
      _
    $region9: #{deep_nn_forward.1} parent=1 // pred_fallthru
      _
    // Predicated region
    $region10: #{deep_nn_forward.1} parent=1 // pred_check
      _
    $region11: #{deep_nn_forward.1} parent=1 // pred_check_branch
      %18 = sbr.rel (0) target = $region13
    $region12: #{deep_nn_forward.1} parent=1 // pred_region
      _
    $region13: #{deep_nn_forward.1} parent=1 // pred_fallthru
      _
    // Predicated region
    $region14: #{deep_nn_forward.1} parent=1 // pred_check
      _
    $region15: #{deep_nn_forward.1} parent=1 // pred_check_branch
      %20 = sbr.rel (0) target = $region17
    $region16: #{deep_nn_forward.1} parent=1 // pred_region
      _
    $region17: #{deep_nn_forward.1} parent=1 // pred_fallthru
      _
    // Predicated region
    $region18: #{deep_nn_forward.1} parent=1 // pred_check
      _
    $region19: #{deep_nn_forward.1} parent=1 // pred_check_branch
      %22 = sbr.rel (0) target = $region21
    $region20: #{deep_nn_forward.1} parent=1 // pred_region
      _
    $region21: #{deep_nn_forward.1} parent=1 // pred_fallthru
      _
    // Predicated region
    $region22: #{deep_nn_forward.1} parent=1 // pred_check
      _
    $region23: #{deep_nn_forward.1} parent=1 // pred_check_branch
      %24 = sbr.rel (0) target = $region25
    $region24: #{deep_nn_forward.1} parent=1 // pred_region
      _
    $region25: #{deep_nn_forward.1} parent=1 // pred_fallthru
      _
    // Predicated region
    $region26: #{deep_nn_forward.1} parent=1 // pred_check
      _
    $region27: #{deep_nn_forward.1} parent=1 // pred_check_branch
      %26 = sbr.rel (0) target = $region29
    $region28: #{deep_nn_forward.1} parent=1 // pred_region
      _
    $region29: #{deep_nn_forward.1} parent=1 // pred_fallthru
      _
    %v28 = vld [vmem:[%s0] sm:$0xff]
    %v29 = vld [vmem:[%s0 + $0x8] sm:$0xff]
    %v30 = vld [vmem:[%s0 + $0x10] sm:$0xff]
    %v31 = vld [vmem:[%s0 + $0x18] sm:$0xff]
    %v32 = vld [vmem:[%s0 + $0x20] sm:$0xff]
    %v33 = vld [vmem:[%s0 + $0x28] sm:$0xff]
    %v34 = vld [vmem:[%s0 + $0x30] sm:$0xff]
    %v35 = vld [vmem:[%s0 + $0x38] sm:$0xff]
    %v36 = vld [vmem:[%s0 + $0x40] sm:$0xff]
    %v37 = vld [vmem:[%s0 + $0x48] sm:$0xff]
    %v38 = vld [vmem:[%s0 + $0x50] sm:$0xff]
    %v39 = vld [vmem:[%s0 + $0x58] sm:$0xff]
    %v40 = vld [vmem:[%s0 + $0x60] sm:$0xff]
    %v41 = vld [vmem:[%s0 + $0x68] sm:$0xff]
    %v42 = vld [vmem:[%s0 + $0x70] sm:$0xff]
    %v43 = vld [vmem:[%s0 + $0x78] sm:$0xff]
    %v44 = vpack.c.bf16 %v29, %v28
    %v45 = vpack.c.bf16 %v31, %v30
    %v46 = vpack.c.bf16 %v33, %v32
    %v47 = vpack.c.bf16 %v35, %v34
    %v48 = vpack.c.bf16 %v37, %v36
    %v49 = vpack.c.bf16 %v39, %v38
    %v50 = vpack.c.bf16 %v41, %v40
    %v51 = vpack.c.bf16 %v43, %v42
    %v52 = vld [vmem:[%s1] sm:$0xf]
    %v53 = vld [vmem:[%s1 + $0x4] sm:$0xf]
    %v54 = vld [vmem:[%s1 + $0x8] sm:$0xf]
    %v55 = vld [vmem:[%s1 + $0xc] sm:$0xf]
    %v56 = vld [vmem:[%s1 + $0x10] sm:$0xf]
    %v57 = vld [vmem:[%s1 + $0x14] sm:$0xf]
    %v58 = vld [vmem:[%s1 + $0x18] sm:$0xf]
    %v59 = vld [vmem:[%s1 + $0x1c] sm:$0xf]
    %v60 = vld [vmem:[%s2] sm:$0x1]
    %v62 = vlaneseq
    %v63 = vshrl.u32 %v62, 7
    %v64 = vsub.s32 0, %v63
    %v65 = vrot.slane %v60, %v64
    %v75 = vunpack.c.l.b16 %v52
    %v76 = vunpack.c.l.b16 %v53
    %v77 = vunpack.c.l.b16 %v54
    %v78 = vunpack.c.l.b16 %v55
    %v79 = vunpack.c.l.b16 %v56
    %v80 = vunpack.c.l.b16 %v57
    %v81 = vunpack.c.l.b16 %v58
    %v82 = vunpack.c.l.b16 %v59
    %v83 = vpack.c.b16 %v76, %v75
    %v84 = vpack.c.b16 %v78, %v77
    %v85 = vpack.c.b16 %v80, %v79
    %v86 = vpack.c.b16 %v82, %v81
    %vm91 = vcmask 523264
    %v93 = vsel %vm91, %v44, 0
    %v96 = vsel %vm91, %v45, 0
    %v99 = vsel %vm91, %v46, 0
    %v102 = vsel %vm91, %v47, 0
    %v105 = vsel %vm91, %v48, 0
    %v108 = vsel %vm91, %v49, 0
    %v111 = vsel %vm91, %v50, 0
    %v114 = vsel %vm91, %v51, 0
    %116 = vmatprep.subr.bf16.mxu0 0
    %117 = vmatpush1.bf16.msra.mxu0 %v83
    %118 = vmatprep.subr.bf16.mxu0 0
    %119 = vmatpush1.bf16.msra.mxu0 %v84
    %120 = vmatprep.subr.bf16.mxu0 0
    %121 = vmatpush1.bf16.msra.mxu0 %v85
    %122 = vmatprep.subr.bf16.mxu0 0
    %123 = vmatpush1.bf16.msra.mxu0 %v86
    %124 = vmatprep.subr.bf16.mxu0 0
    %125 = vmatpush1.bf16.msra.mxu0 0
    %126 = vmatprep.subr.bf16.mxu0 0
    %127 = vmatpush1.bf16.msra.mxu0 0
    %128 = vmatprep.subr.bf16.mxu0 0
    %129 = vmatpush1.bf16.msra.mxu0 0
    %130 = vmatprep.subr.bf16.mxu0 0
    %131 = vmatpush1.bf16.msra.mxu0 0
    %132 = vmatprep.subr.bf16.mxu0 0
    %133 = vmatpush1.bf16.msra.mxu0 0
    %134 = vmatprep.subr.bf16.mxu0 0
    %135 = vmatpush1.bf16.msra.mxu0 0
    %136 = vmatprep.subr.bf16.mxu0 0
    %137 = vmatpush1.bf16.msra.mxu0 0
    %138 = vmatprep.subr.bf16.mxu0 0
    %139 = vmatpush1.bf16.msra.mxu0 0
    %140 = vmatprep.subr.bf16.mxu0 0
    %141 = vmatpush1.bf16.msra.mxu0 0
    %142 = vmatprep.subr.bf16.mxu0 0
    %143 = vmatpush1.bf16.msra.mxu0 0
    %144 = vmatprep.subr.bf16.mxu0 0
    %145 = vmatpush1.bf16.msra.mxu0 0
    %146 = vmatprep.subr.bf16.mxu0 0
    %147 = vmatpush1.bf16.msra.mxu0 0
    %148 = vmatprep.mubr.bf16.mxu0 0
    %149 = vmatmul.mubr.bf16.gmra.mrb[0].mxu0 %v93
    %v150 = vpop.f32.mrb[0].mxu0
    %v151 = vadd.f32 %v65, %v150
    %v152 = vpop.f32.mrb[0].mxu0
    %v153 = vpop.f32.mrb[0].mxu0
    %v154 = vadd.f32 %v65, %v153
    %v155 = vpop.f32.mrb[0].mxu0
    %156 = vmatprep.mubr.bf16.mxu0 0
    %157 = vmatmul.mubr.bf16.gmra.mrb[0].mxu0 %v96
    %v158 = vpop.f32.mrb[0].mxu0
    %v159 = vadd.f32 %v65, %v158
    %v160 = vpop.f32.mrb[0].mxu0
    %v161 = vpop.f32.mrb[0].mxu0
    %v162 = vadd.f32 %v65, %v161
    %v163 = vpop.f32.mrb[0].mxu0
    %164 = vmatprep.mubr.bf16.mxu0 0
    %165 = vmatmul.mubr.bf16.gmra.mrb[0].mxu0 %v99
    %v166 = vpop.f32.mrb[0].mxu0
    %v167 = vadd.f32 %v65, %v166
    %v168 = vpop.f32.mrb[0].mxu0
    %v169 = vpop.f32.mrb[0].mxu0
    %v170 = vadd.f32 %v65, %v169
    %v171 = vpop.f32.mrb[0].mxu0
    %172 = vmatprep.mubr.bf16.mxu0 0
    %173 = vmatmul.mubr.bf16.gmra.mrb[0].mxu0 %v102
    %v174 = vpop.f32.mrb[0].mxu0
    %v175 = vadd.f32 %v65, %v174
    %v176 = vpop.f32.mrb[0].mxu0
    %v177 = vpop.f32.mrb[0].mxu0
    %v178 = vadd.f32 %v65, %v177
    %v179 = vpop.f32.mrb[0].mxu0
    %180 = vmatprep.mubr.bf16.mxu0 0
    %181 = vmatmul.mubr.bf16.gmra.mrb[0].mxu0 %v105
    %v182 = vpop.f32.mrb[0].mxu0
    %v183 = vadd.f32 %v65, %v182
    %v184 = vpop.f32.mrb[0].mxu0
    %v185 = vpop.f32.mrb[0].mxu0
    %v186 = vadd.f32 %v65, %v185
    %v187 = vpop.f32.mrb[0].mxu0
    %188 = vmatprep.mubr.bf16.mxu0 0
    %189 = vmatmul.mubr.bf16.gmra.mrb[0].mxu0 %v108
    %v190 = vpop.f32.mrb[0].mxu0
    %v191 = vadd.f32 %v65, %v190
    %v192 = vpop.f32.mrb[0].mxu0
    %v193 = vpop.f32.mrb[0].mxu0
    %v194 = vadd.f32 %v65, %v193
    %v195 = vpop.f32.mrb[0].mxu0
    %196 = vmatprep.mubr.bf16.mxu0 0
    %197 = vmatmul.mubr.bf16.gmra.mrb[0].mxu0 %v111
    %v198 = vpop.f32.mrb[0].mxu0
    %v199 = vadd.f32 %v65, %v198
    %v200 = vpop.f32.mrb[0].mxu0
    %v201 = vpop.f32.mrb[0].mxu0
    %v202 = vadd.f32 %v65, %v201
    %v203 = vpop.f32.mrb[0].mxu0
    %204 = vmatprep.mubr.bf16.mxu0 0
    %205 = vmatmul.mubr.bf16.gmra.mrb[0].mxu0 %v114
    %v206 = vpop.f32.mrb[0].mxu0
    %v207 = vadd.f32 %v65, %v206
    %v208 = vpop.f32.mrb[0].mxu0
    %v209 = vpop.f32.mrb[0].mxu0
    %v210 = vadd.f32 %v65, %v209
    %v211 = vpop.f32.mrb[0].mxu0
    %212 = vdwg.mxu0
    %v213 = vmax.f32 %v151, 0.0
    %v214 = vmax.f32 %v154, 0.0
    %v215 = vmax.f32 %v159, 0.0
    %v216 = vmax.f32 %v162, 0.0
    %v217 = vmax.f32 %v167, 0.0
    %v218 = vmax.f32 %v170, 0.0
    %v219 = vmax.f32 %v175, 0.0
    %v220 = vmax.f32 %v178, 0.0
    %v221 = vmax.f32 %v183, 0.0
    %v222 = vmax.f32 %v186, 0.0
    %v223 = vmax.f32 %v191, 0.0
    %v224 = vmax.f32 %v194, 0.0
    %v225 = vmax.f32 %v199, 0.0
    %v226 = vmax.f32 %v202, 0.0
    %v227 = vmax.f32 %v207, 0.0
    %v228 = vmax.f32 %v210, 0.0
    %v229 = vpack.c.bf16 %v214, %v213
    %v230 = vpack.c.bf16 %v216, %v215
    %v231 = vpack.c.bf16 %v218, %v217
    %v232 = vpack.c.bf16 %v220, %v219
    %v233 = vpack.c.bf16 %v222, %v221
    %v234 = vpack.c.bf16 %v224, %v223
    %v235 = vpack.c.bf16 %v226, %v225
    %v236 = vpack.c.bf16 %v228, %v227
    %v237 = vld [vmem:[%s3] sm:$0xf]
    %v238 = vld [vmem:[%s3 + $0x4] sm:$0xf]
    %v239 = vld [vmem:[%s3 + $0x8] sm:$0xf]
    %v240 = vld [vmem:[%s3 + $0xc] sm:$0xf]
    %v241 = vld [vmem:[%s4] sm:$0x1]
    %v243 = vlaneseq
    %v244 = vshrl.u32 %v243, 7
    %v245 = vsub.s32 0, %v244
    %v246 = vrot.slane %v241, %v245
    %v252 = vunpack.c.l.b16 %v237
    %v253 = vunpack.c.l.b16 %v238
    %v254 = vunpack.c.l.b16 %v239
    %v255 = vunpack.c.l.b16 %v240
    %v256 = vpack.c.b16 %v253, %v252
    %v257 = vpack.c.b16 %v255, %v254
    %vm260 = vcmask 261120
    %v262 = vsel %vm260, %v229, 0
    %v265 = vsel %vm260, %v230, 0
    %v268 = vsel %vm260, %v231, 0
    %v271 = vsel %vm260, %v232, 0
    %v274 = vsel %vm260, %v233, 0
    %v277 = vsel %vm260, %v234, 0
    %v280 = vsel %vm260, %v235, 0
    %v283 = vsel %vm260, %v236, 0
    %285 = vmatprep.subr.bf16.mxu0 0
    %286 = vmatpush1.bf16.msra.mxu0 %v256
    %287 = vmatprep.subr.bf16.mxu0 0
    %288 = vmatpush1.bf16.msra.mxu0 %v257
    %289 = vmatprep.subr.bf16.mxu0 0
    %290 = vmatpush1.bf16.msra.mxu0 0
    %291 = vmatprep.subr.bf16.mxu0 0
    %292 = vmatpush1.bf16.msra.mxu0 0
    %293 = vmatprep.subr.bf16.mxu0 0
    %294 = vmatpush1.bf16.msra.mxu0 0
    %295 = vmatprep.subr.bf16.mxu0 0
    %296 = vmatpush1.bf16.msra.mxu0 0
    %297 = vmatprep.subr.bf16.mxu0 0
    %298 = vmatpush1.bf16.msra.mxu0 0
    %299 = vmatprep.subr.bf16.mxu0 0
    %300 = vmatpush1.bf16.msra.mxu0 0
    %301 = vmatprep.subr.bf16.mxu0 0
    %302 = vmatpush1.bf16.msra.mxu0 0
    %303 = vmatprep.subr.bf16.mxu0 0
    %304 = vmatpush1.bf16.msra.mxu0 0
    %305 = vmatprep.subr.bf16.mxu0 0
    %306 = vmatpush1.bf16.msra.mxu0 0
    %307 = vmatprep.subr.bf16.mxu0 0
    %308 = vmatpush1.bf16.msra.mxu0 0
    %309 = vmatprep.subr.bf16.mxu0 0
    %310 = vmatpush1.bf16.msra.mxu0 0
    %311 = vmatprep.subr.bf16.mxu0 0
    %312 = vmatpush1.bf16.msra.mxu0 0
    %313 = vmatprep.subr.bf16.mxu0 0
    %314 = vmatpush1.bf16.msra.mxu0 0
    %315 = vmatprep.subr.bf16.mxu0 0
    %316 = vmatpush1.bf16.msra.mxu0 0
    %317 = vmatprep.mubr.bf16.mxu0 0
    %318 = vmatmul.mubr.bf16.gmra.mrb[0].mxu0 %v262
    %v319 = vpop.f32.mrb[0].mxu0
    %v320 = vadd.f32 %v246, %v319
    %v321 = vpop.f32.mrb[0].mxu0
    %v322 = vpop.f32.mrb[0].mxu0
    %v323 = vadd.f32 %v246, %v322
    %v324 = vpop.f32.mrb[0].mxu0
    %325 = vmatprep.mubr.bf16.mxu0 0
    %326 = vmatmul.mubr.bf16.gmra.mrb[0].mxu0 %v265
    %v327 = vpop.f32.mrb[0].mxu0
    %v328 = vadd.f32 %v246, %v327
    %v329 = vpop.f32.mrb[0].mxu0
    %v330 = vpop.f32.mrb[0].mxu0
    %v331 = vadd.f32 %v246, %v330
    %v332 = vpop.f32.mrb[0].mxu0
    %333 = vmatprep.mubr.bf16.mxu0 0
    %334 = vmatmul.mubr.bf16.gmra.mrb[0].mxu0 %v268
    %v335 = vpop.f32.mrb[0].mxu0
    %v336 = vadd.f32 %v246, %v335
    %v337 = vpop.f32.mrb[0].mxu0
    %v338 = vpop.f32.mrb[0].mxu0
    %v339 = vadd.f32 %v246, %v338
    %v340 = vpop.f32.mrb[0].mxu0
    %341 = vmatprep.mubr.bf16.mxu0 0
    %342 = vmatmul.mubr.bf16.gmra.mrb[0].mxu0 %v271
    %v343 = vpop.f32.mrb[0].mxu0
    %v344 = vadd.f32 %v246, %v343
    %v345 = vpop.f32.mrb[0].mxu0
    %v346 = vpop.f32.mrb[0].mxu0
    %v347 = vadd.f32 %v246, %v346
    %v348 = vpop.f32.mrb[0].mxu0
    %349 = vmatprep.mubr.bf16.mxu0 0
    %350 = vmatmul.mubr.bf16.gmra.mrb[0].mxu0 %v274
    %v351 = vpop.f32.mrb[0].mxu0
    %v352 = vadd.f32 %v246, %v351
    %v353 = vpop.f32.mrb[0].mxu0
    %v354 = vpop.f32.mrb[0].mxu0
    %v355 = vadd.f32 %v246, %v354
    %v356 = vpop.f32.mrb[0].mxu0
    %357 = vmatprep.mubr.bf16.mxu0 0
    %358 = vmatmul.mubr.bf16.gmra.mrb[0].mxu0 %v277
    %v359 = vpop.f32.mrb[0].mxu0
    %v360 = vadd.f32 %v246, %v359
    %v361 = vpop.f32.mrb[0].mxu0
    %v362 = vpop.f32.mrb[0].mxu0
    %v363 = vadd.f32 %v246, %v362
    %v364 = vpop.f32.mrb[0].mxu0
    %365 = vmatprep.mubr.bf16.mxu0 0
    %366 = vmatmul.mubr.bf16.gmra.mrb[0].mxu0 %v280
    %v367 = vpop.f32.mrb[0].mxu0
    %v368 = vadd.f32 %v246, %v367
    %v369 = vpop.f32.mrb[0].mxu0
    %v370 = vpop.f32.mrb[0].mxu0
    %v371 = vadd.f32 %v246, %v370
    %v372 = vpop.f32.mrb[0].mxu0
    %373 = vmatprep.mubr.bf16.mxu0 0
    %374 = vmatmul.mubr.bf16.gmra.mrb[0].mxu0 %v283
    %v375 = vpop.f32.mrb[0].mxu0
    %v376 = vadd.f32 %v246, %v375
    %v377 = vpop.f32.mrb[0].mxu0
    %v378 = vpop.f32.mrb[0].mxu0
    %v379 = vadd.f32 %v246, %v378
    %v380 = vpop.f32.mrb[0].mxu0
    %381 = vdwg.mxu0
    %v382 = vmax.f32 %v320, 0.0
    %v383 = vmax.f32 %v323, 0.0
    %v384 = vmax.f32 %v328, 0.0
    %v385 = vmax.f32 %v331, 0.0
    %v386 = vmax.f32 %v336, 0.0
    %v387 = vmax.f32 %v339, 0.0
    %v388 = vmax.f32 %v344, 0.0
    %v389 = vmax.f32 %v347, 0.0
    %v390 = vmax.f32 %v352, 0.0
    %v391 = vmax.f32 %v355, 0.0
    %v392 = vmax.f32 %v360, 0.0
    %v393 = vmax.f32 %v363, 0.0
    %v394 = vmax.f32 %v368, 0.0
    %v395 = vmax.f32 %v371, 0.0
    %v396 = vmax.f32 %v376, 0.0
    %v397 = vmax.f32 %v379, 0.0
    %v398 = vpack.c.bf16 %v383, %v382
    %v399 = vpack.c.bf16 %v385, %v384
    %v400 = vpack.c.bf16 %v387, %v386
    %v401 = vpack.c.bf16 %v389, %v388
    %v402 = vpack.c.bf16 %v391, %v390
    %v403 = vpack.c.bf16 %v393, %v392
    %v404 = vpack.c.bf16 %v395, %v394
    %v405 = vpack.c.bf16 %v397, %v396
    %v406 = vld [vmem:[%s5] sm:$0xf]
    %v407 = vld [vmem:[%s5 + $0x4] sm:$0x3]
    %v408 = vld [vmem:[%s6] sm:$0x1]
    %v410 = vlaneseq
    %v411 = vshrl.u32 %v410, 7
    %v412 = vsub.s32 0, %v411
    %v413 = vrot.slane %v408, %v412
    %v417 = vunpack.c.l.b16 %v406
    %v418 = vunpack.c.l.b16 %v407
    %v419 = vpack.c.b16 %v418, %v417
    %vm420 = vcmask 97280
    %v422 = vsel %vm420, %v398, 0
    %v425 = vsel %vm420, %v399, 0
    %v428 = vsel %vm420, %v400, 0
    %v431 = vsel %vm420, %v401, 0
    %v434 = vsel %vm420, %v402, 0
    %v437 = vsel %vm420, %v403, 0
    %v440 = vsel %vm420, %v404, 0
    %v443 = vsel %vm420, %v405, 0
    %vm445 = vcmask 1045504
    %v447 = vsel %vm445, %v419, 0
    %449 = vmatprep.subr.bf16.mxu0 0
    %450 = vmatpush1.bf16.msra.mxu0 %v447
    %451 = vmatprep.subr.bf16.mxu0 0
    %452 = vmatpush1.bf16.msra.mxu0 0
    %453 = vmatprep.subr.bf16.mxu0 0
    %454 = vmatpush1.bf16.msra.mxu0 0
    %455 = vmatprep.subr.bf16.mxu0 0
    %456 = vmatpush1.bf16.msra.mxu0 0
    %457 = vmatprep.subr.bf16.mxu0 0
    %458 = vmatpush1.bf16.msra.mxu0 0
    %459 = vmatprep.subr.bf16.mxu0 0
    %460 = vmatpush1.bf16.msra.mxu0 0
    %461 = vmatprep.subr.bf16.mxu0 0
    %462 = vmatpush1.bf16.msra.mxu0 0
    %463 = vmatprep.subr.bf16.mxu0 0
    %464 = vmatpush1.bf16.msra.mxu0 0
    %465 = vmatprep.subr.bf16.mxu0 0
    %466 = vmatpush1.bf16.msra.mxu0 0
    %467 = vmatprep.subr.bf16.mxu0 0
    %468 = vmatpush1.bf16.msra.mxu0 0
    %469 = vmatprep.subr.bf16.mxu0 0
    %470 = vmatpush1.bf16.msra.mxu0 0
    %471 = vmatprep.subr.bf16.mxu0 0
    %472 = vmatpush1.bf16.msra.mxu0 0
    %473 = vmatprep.subr.bf16.mxu0 0
    %474 = vmatpush1.bf16.msra.mxu0 0
    %475 = vmatprep.subr.bf16.mxu0 0
    %476 = vmatpush1.bf16.msra.mxu0 0
    %477 = vmatprep.subr.bf16.mxu0 0
    %478 = vmatpush1.bf16.msra.mxu0 0
    %479 = vmatprep.subr.bf16.mxu0 0
    %480 = vmatpush1.bf16.msra.mxu0 0
    %481 = vmatprep.mubr.bf16.mxu0 0
    %482 = vmatmul.mubr.bf16.gmra.mrb[0].mxu0 %v422
    %v483 = vpop.f32.mrb[0].mxu0
    %v484 = vadd.f32 %v413, %v483
    %v485 = vpop.f32.mrb[0].mxu0
    %v486 = vpop.f32.mrb[0].mxu0
    %v487 = vadd.f32 %v413, %v486
    %v488 = vpop.f32.mrb[0].mxu0
    %489 = vmatprep.mubr.bf16.mxu0 0
    %490 = vmatmul.mubr.bf16.gmra.mrb[0].mxu0 %v425
    %v491 = vpop.f32.mrb[0].mxu0
    %v492 = vadd.f32 %v413, %v491
    %v493 = vpop.f32.mrb[0].mxu0
    %v494 = vpop.f32.mrb[0].mxu0
    %v495 = vadd.f32 %v413, %v494
    %v496 = vpop.f32.mrb[0].mxu0
    %497 = vmatprep.mubr.bf16.mxu0 0
    %498 = vmatmul.mubr.bf16.gmra.mrb[0].mxu0 %v428
    %v499 = vpop.f32.mrb[0].mxu0
    %v500 = vadd.f32 %v413, %v499
    %v501 = vpop.f32.mrb[0].mxu0
    %v502 = vpop.f32.mrb[0].mxu0
    %v503 = vadd.f32 %v413, %v502
    %v504 = vpop.f32.mrb[0].mxu0
    %505 = vmatprep.mubr.bf16.mxu0 0
    %506 = vmatmul.mubr.bf16.gmra.mrb[0].mxu0 %v431
    %v507 = vpop.f32.mrb[0].mxu0
    %v508 = vadd.f32 %v413, %v507
    %v509 = vpop.f32.mrb[0].mxu0
    %v510 = vpop.f32.mrb[0].mxu0
    %v511 = vadd.f32 %v413, %v510
    %v512 = vpop.f32.mrb[0].mxu0
    %513 = vmatprep.mubr.bf16.mxu0 0
    %514 = vmatmul.mubr.bf16.gmra.mrb[0].mxu0 %v434
    %v515 = vpop.f32.mrb[0].mxu0
    %v516 = vadd.f32 %v413, %v515
    %v517 = vpop.f32.mrb[0].mxu0
    %v518 = vpop.f32.mrb[0].mxu0
    %v519 = vadd.f32 %v413, %v518
    %v520 = vpop.f32.mrb[0].mxu0
    %521 = vmatprep.mubr.bf16.mxu0 0
    %522 = vmatmul.mubr.bf16.gmra.mrb[0].mxu0 %v437
    %v523 = vpop.f32.mrb[0].mxu0
    %v524 = vadd.f32 %v413, %v523
    %v525 = vpop.f32.mrb[0].mxu0
    %v526 = vpop.f32.mrb[0].mxu0
    %v527 = vadd.f32 %v413, %v526
    %v528 = vpop.f32.mrb[0].mxu0
    %529 = vmatprep.mubr.bf16.mxu0 0
    %530 = vmatmul.mubr.bf16.gmra.mrb[0].mxu0 %v440
    %v531 = vpop.f32.mrb[0].mxu0
    %v532 = vadd.f32 %v413, %v531
    %v533 = vpop.f32.mrb[0].mxu0
    %v534 = vpop.f32.mrb[0].mxu0
    %v535 = vadd.f32 %v413, %v534
    %v536 = vpop.f32.mrb[0].mxu0
    %537 = vmatprep.mubr.bf16.mxu0 0
    %538 = vmatmul.mubr.bf16.gmra.mrb[0].mxu0 %v443
    %v539 = vpop.f32.mrb[0].mxu0
    %v540 = vadd.f32 %v413, %v539
    %v541 = vpop.f32.mrb[0].mxu0
    %v542 = vpop.f32.mrb[0].mxu0
    %v543 = vadd.f32 %v413, %v542
    %v544 = vpop.f32.mrb[0].mxu0
    %545 = vdwg.mxu0
    %v546 = vmax.f32 %v484, 0.0
    %v547 = vmax.f32 %v487, 0.0
    %v548 = vmax.f32 %v492, 0.0
    %v549 = vmax.f32 %v495, 0.0
    %v550 = vmax.f32 %v500, 0.0
    %v551 = vmax.f32 %v503, 0.0
    %v552 = vmax.f32 %v508, 0.0
    %v553 = vmax.f32 %v511, 0.0
    %v554 = vmax.f32 %v516, 0.0
    %v555 = vmax.f32 %v519, 0.0
    %v556 = vmax.f32 %v524, 0.0
    %v557 = vmax.f32 %v527, 0.0
    %v558 = vmax.f32 %v532, 0.0
    %v559 = vmax.f32 %v535, 0.0
    %v560 = vmax.f32 %v540, 0.0
    %v561 = vmax.f32 %v543, 0.0
    %562 = vxpose.xlu0.b32.start [1/16] %v546, 128
    %563 = vxpose.xlu0.b32.cont [2/16] %v547, 128
    %564 = vxpose.xlu0.b32.cont [3/16] %v548, 128
    %565 = vxpose.xlu0.b32.cont [4/16] %v549, 128
    %566 = vxpose.xlu0.b32.cont [5/16] %v550, 128
    %567 = vxpose.xlu0.b32.cont [6/16] %v551, 128
    %568 = vxpose.xlu0.b32.cont [7/16] %v552, 128
    %569 = vxpose.xlu0.b32.cont [8/16] %v553, 128
    %570 = vxpose.xlu0.b32.cont [9/16] %v554, 128
    %571 = vxpose.xlu0.b32.cont [10/16] %v555, 128
    %572 = vxpose.xlu0.b32.cont [11/16] %v556, 128
    %573 = vxpose.xlu0.b32.cont [12/16] %v557, 128
    %574 = vxpose.xlu0.b32.cont [13/16] %v558, 128
    %575 = vxpose.xlu0.b32.cont [14/16] %v559, 128
    %576 = vxpose.xlu0.b32.cont [15/16] %v560, 128
    %577 = vxpose.xlu0.b32.end [16/16] %v561, 128
    %v578 = vpop.trf.xlu0
    %v579 = vpop.trf.xlu0
    %v580 = vpop.trf.xlu0
    %v581 = vpop.trf.xlu0
    %v582 = vpop.trf.xlu0
    %v583 = vpop.trf.xlu0
    %v584 = vpop.trf.xlu0
    %v585 = vpop.trf.xlu0
    %v586 = vpop.trf.xlu0
    %v587 = vpop.trf.xlu0
    %v588 = vpop.trf.xlu0
    %v589 = vpop.trf.xlu0
    %v590 = vpop.trf.xlu0
    %v591 = vpop.trf.xlu0
    %v592 = vpop.trf.xlu0
    %v593 = vpop.trf.xlu0
    %594 = vst [vmem:[#allocation2] sm:$0x7] %v578
    // Predicated region
    $region30: #{deep_nn_forward.1} parent=1 // pred_check
      _
    $region31: #{deep_nn_forward.1} parent=1 // pred_check_branch
      %596 = sbr.rel (0) target = $region33
    $region32: #{deep_nn_forward.1} parent=1 // pred_region
      %s598 = ssub.s32 64, 64
      %599 = vsyncadd [#allocation3], %s598
      %s601 = sshll.u32 [#allocation2], 4
      %s602 = int_to_ptr.vmem [resolvable:$true] %s601
      %604 = dma.vmem_to_hbm [thread:$0]  %s602, 64, %s7, [#allocation3]
    $region33: #{deep_nn_forward.1} parent=1 // pred_fallthru
      _
    // Predicated region
    $region34: #{deep_nn_forward.1} parent=1 // pred_check
      _
    $region35: #{deep_nn_forward.1} parent=1 // pred_check_branch
      %606 = sbr.rel (0) target = $region37
    $region36: #{deep_nn_forward.1} parent=1 // pred_region
      %607 = dma.done [#allocation3], 64
    $region37: #{deep_nn_forward.1} parent=1 // pred_fallthru
      _
    %608 = vsyncpa [#allocation3], 1

</llo_original>
